<compile_context>
chip_gen: v7x
topology: tpu7x:2x2x1
jax: 0.10.0
libtpu: 0.0.40
codegen_flags: <defaults>
</compile_context>

<pallas_src>
import functools

import jax
import jax.numpy as jnp
from jax import lax
from jax.experimental import pallas as pl
from jax.experimental.pallas import tpu as pltpu


# ------------------------------ kernel helpers ------------------------------

def _dot_bT(a, b):
    """a (M, K) @ b.T with b (N, K) -> (M, N), f32 accumulation on the MXU."""
    return lax.dot_general(a, b, (((1,), (1,)), ((), ())),
                           preferred_element_type=jnp.float32)


def _init_stats(m_scr, d_scr, acc_scr):
    m_scr[...] = jnp.full_like(m_scr, -jnp.inf)
    d_scr[...] = jnp.zeros_like(d_scr)
    acc_scr[...] = jnp.zeros_like(acc_scr)


def _online_softmax_step(s_row, enc, l_idx, n_l,
                         scores_ref, ctx_ref, m_scr, d_scr, acc_scr):
    """s_row: (1, TILE_L) f32 scores of this tile; enc: (TILE_L, Hv) f32."""
    m_prev = m_scr[...]                                            # (1, 1)
    m_new = jnp.maximum(m_prev, jnp.max(s_row, axis=-1, keepdims=True))
    alpha = jnp.exp(m_prev - m_new)                                # (1, 1)
    p = jnp.exp(s_row - m_new)                                     # (1, TILE_L)
    d_scr[...] = alpha * d_scr[...] + jnp.sum(p, axis=-1, keepdims=True)
    # context partial sum on the MXU: (1, TILE_L) @ (TILE_L, Hv)
    acc_scr[...] = alpha * acc_scr[...] + jnp.dot(
        p, enc, preferred_element_type=jnp.float32)
    m_scr[...] = m_new
    # stash the raw scores of this tile; normalized lane-dense on the last tile.
    scores_ref[pl.ds(l_idx, 1), :] = s_row

    @pl.when(l_idx == n_l - 1)
    def _():
        inv_d = pl.reciprocal(d_scr[...], approx=True)             # EUP slot
        scores_ref[...] = jnp.exp(scores_ref[...] - m_scr[...]) * inv_d
        ctx_ref[...] = (acc_scr[...] * inv_d).astype(ctx_ref.dtype)


def _mask_enc(enc, l_idx, tile_l, seq_len):
    row = lax.broadcasted_iota(jnp.int32, (tile_l, 1), 0)
    return jnp.where(l_idx * tile_l + row < seq_len, enc, 0.0)


def _mask_score(s_row, l_idx, tile_l, seq_len):
    lane = lax.broadcasted_iota(jnp.int32, (1, tile_l), 1)
    return jnp.where(l_idx * tile_l + lane < seq_len, s_row, -jnp.inf)


# ------------------------------ kernels ------------------------------

def _dot_attn_kernel(q_ref, enc_ref, scores_ref, ctx_ref,
                     m_scr, d_scr, acc_scr, *, seq_len, tile_l):
    """'dot' and (refactored) 'general': score[l] = enc[l, :] . q."""
    l_idx = pl.program_id(1)
    n_l = pl.num_programs(1)

    @pl.when(l_idx == 0)
    def _():
        _init_stats(m_scr, d_scr, acc_scr)

    enc = enc_ref[...].astype(jnp.float32)                         # (TILE_L, Hv)
    if seq_len % tile_l != 0:
        enc = _mask_enc(enc, l_idx, tile_l, seq_len)
    q = q_ref[...].astype(jnp.float32)                             # (1, Hv)

    s_row = _dot_bT(q, enc)                                        # (1, TILE_L)
    if seq_len % tile_l != 0:
        s_row = _mask_score(s_row, l_idx, tile_l, seq_len)

    _online_softmax_step(s_row, enc, l_idx, n_l,
                         scores_ref, ctx_ref, m_scr, d_scr, acc_scr)


def _mlp_attn_kernel(dec_ref, enc_ref, wq_ref, wv_ref, b_ref, v_ref,
                     scores_ref, ctx_ref, qpart_scr, m_scr, d_scr, acc_scr,
                     *, seq_len, tile_l):
    """'add' and 'concat': score[l] = v . tanh(q @ Wq + enc[l] @ Wv + b)."""
    l_idx = pl.program_id(1)
    n_l = pl.num_programs(1)

    @pl.when(l_idx == 0)
    def _():
        _init_stats(m_scr, d_scr, acc_scr)
        # hoist the query projection out of the L loop (only depends on b)
        qpart_scr[...] = jnp.dot(dec_ref[...].astype(jnp.float32), wq_ref[...],
                                 preferred_element_type=jnp.float32) + b_ref[...]

    enc = enc_ref[...].astype(jnp.float32)                         # (TILE_L, Hv)
    if seq_len % tile_l != 0:
        enc = _mask_enc(enc, l_idx, tile_l, seq_len)

    t = jnp.tanh(jnp.dot(enc, wv_ref[...], preferred_element_type=jnp.float32)
                 + qpart_scr[...])                                 # (TILE_L, A)
    s_row = _dot_bT(v_ref[...], t)                                 # (1, TILE_L)
    if seq_len % tile_l != 0:
        s_row = _mask_score(s_row, l_idx, tile_l, seq_len)

    _online_softmax_step(s_row, enc, l_idx, n_l,
                         scores_ref, ctx_ref, m_scr, d_scr, acc_scr)


# ------------------------------ wrapper ------------------------------

def attention_forward(name, dec_hidden, enc_outputs, params, *, max_tile_l=512):
    """dec_hidden: (B, Hq); enc_outputs: (L, B, Hv) (PyTorch layout, any float dtype).

    Returns (context (B, 1, Hv), align (B, L)), matching AttentionLayer.forward.
    """
    L, B, Hv = enc_outputs.shape
    Hq = dec_hidden.shape[-1]

    tile_l = L if L <= max_tile_l else max_tile_l       # 512 is a multiple of 128
    n_l = pl.cdiv(L, tile_l)
    grid = (B, n_l)

    # Free unit-axis reshape only — no transpose / upcast of enc in the wrapper.
    enc4 = enc_outputs.reshape(L, B, 1, Hv)
    enc_spec = pl.BlockSpec((tile_l, None, None, Hv), lambda b, l: (l, b, 0, 0))

    stats_scratch = [pltpu.VMEM((1, 1), jnp.float32),    # running max
                     pltpu.VMEM((1, 1), jnp.float32),    # running denominator
                     pltpu.VMEM((1, Hv), jnp.float32)]   # context accumulator

    if name in ('add', 'concat', 'cat'):
        if name == 'add':
            wq, wv = params['w1'], params['w2']
            bias = params['b1'] + params['b2']
        else:
            w = params['w']                               # (Hq + Hv, A)
            wq, wv = w[:Hq, :], w[Hq:, :]
            bias = params['b']
        v_row = params['v_w']                             # (1, A); v_b is a softmax
        A = wq.shape[1]                                   # shift => dropped
        kernel = functools.partial(_mlp_attn_kernel, seq_len=L, tile_l=tile_l)
        ins = (dec_hidden.reshape(B, 1, Hq), enc4, wq, wv, bias, v_row)
        in_specs = [
            pl.BlockSpec((None, 1, Hq), lambda b, l: (b, 0, 0)),
            enc_spec,
            pl.BlockSpec((Hq, A), lambda b, l: (0, 0)),
            pl.BlockSpec((Hv, A), lambda b, l: (0, 0)),
            pl.BlockSpec((1, A), lambda b, l: (0, 0)),
            pl.BlockSpec((1, A), lambda b, l: (0, 0)),
        ]
        scratch = [pltpu.VMEM((1, A), jnp.float32)] + stats_scratch
        weight_bytes = (Hq * A + Hv * A + 2 * A) * 4
    elif name in ('dot', 'general', 'gen'):
        if name == 'dot':
            assert Hq == Hv, "'dot' attention needs query_dim == value_dim"
            q_eff = dec_hidden
        else:
            # score[b,l] = enc[l,b] . (W^T dec[b]) + dec[b].bias; the bias term is
            # constant over l (removed by softmax), so only this tiny O(B*Hq*Hv)
            # projection survives — 'general' becomes the 'dot' path.
            q_eff = dec_hidden @ params['w'].T            # (B, Hv)
        kernel = functools.partial(_dot_attn_kernel, seq_len=L, tile_l=tile_l)
        ins = (q_eff.reshape(B, 1, Hv), enc4)
        in_specs = [pl.BlockSpec((None, 1, Hv), lambda b, l: (b, 0, 0)), enc_spec]
        scratch = list(stats_scratch)
        weight_bytes = Hv * 4
    else:
        raise NotImplementedError(name)

    out_shape = (jax.ShapeDtypeStruct((B, n_l, tile_l), jnp.float32),   # raw->align
                 jax.ShapeDtypeStruct((B, 1, Hv), enc_outputs.dtype))   # context
    out_specs = (pl.BlockSpec((None, n_l, tile_l), lambda b, l: (b, 0, 0)),
                 pl.BlockSpec((None, 1, Hv), lambda b, l: (b, 0, 0)))

    # VMEM budget: double-buffered enc tiles + resident score/context blocks +
    # weights + headroom. Stays well inside v7x's 64 MiB as well as v5e/v6e.
    esize = jnp.dtype(enc_outputs.dtype).itemsize
    vmem_limit = int(2 * tile_l * Hv * esize + 2 * n_l * tile_l * 4
                     + 2 * weight_bytes + 16 * Hv * 4 + (4 << 20))
    vmem_limit = min(max(vmem_limit, 8 << 20), 48 << 20)

    scores, ctx = pl.pallas_call(
        kernel,
        grid=grid,
        in_specs=in_specs,
        out_specs=out_specs,
        out_shape=out_shape,
        scratch_shapes=scratch,
        compiler_params=pltpu.CompilerParams(
            dimension_semantics=("parallel", "arbitrary"),
            vmem_limit_bytes=vmem_limit),
    )(*ins)

    align = scores.reshape(B, n_l * tile_l)[:, :L]        # drop padded tail columns
    return ctx, align


# ---------------------- pure-JAX reference (checking) ----------------------

def reference(name, dec, enc, p):
    L, B, Hv = enc.shape
    if name == 'add':
        s = jnp.tanh(dec[None] @ p['w1'] + p['b1'] + enc @ p['w2'] + p['b2'])
        score = jnp.einsum('lba,a->lb', s, p['v_w'][0]) + p['v_b'][0, 0]
    elif name == 'dot':
        score = jnp.sum(dec[None] * enc, axis=2)
    elif name in ('general', 'gen'):
        score = jnp.sum(dec[None] * (enc @ p['w'] + p['b']), axis=2)
    elif name in ('concat', 'cat'):
        q = jnp.broadcast_to(dec[None], (L, B, dec.shape[1]))
        cat = jnp.concatenate([q, enc], axis=2)
        s = jnp.tanh(cat @ p['w'] + p['b'])
        score = jnp.einsum('lba,a->lb', s, p['v_w'][0]) + p['v_b'][0, 0]
    else:
        raise NotImplementedError(name)
    align = jax.nn.softmax(score.T, axis=1)                        # (B, L)
    context = jnp.einsum('bl,lbh->bh', align, enc)[:, None, :]     # (B, 1, Hv)
    return context, align


def init_params(key, name, query_dim, value_dim, attn_dim):
    ks = jax.random.split(key, 6)

    def lin(k, fan_in, shape):
        s = 1.0 / jnp.sqrt(fan_in)
        return jax.random.uniform(k, shape, jnp.float32, -s, s)

    if name == 'add':
        return {'w1': lin(ks[0], query_dim, (query_dim, attn_dim)),
                'b1': lin(ks[1], query_dim, (1, attn_dim)),
                'w2': lin(ks[2], value_dim, (value_dim, attn_dim)),
                'b2': lin(ks[3], value_dim, (1, attn_dim)),
                'v_w': lin(ks[4], attn_dim, (1, attn_dim)),
                'v_b': lin(ks[5], attn_dim, (1, 1))}
    if name in ('general', 'gen'):
        return {'w': lin(ks[0], value_dim, (value_dim, query_dim)),
                'b': lin(ks[1], value_dim, (1, query_dim))}
    if name in ('concat', 'cat'):
        d = query_dim + value_dim
        return {'w': lin(ks[0], d, (d, attn_dim)),
                'b': lin(ks[1], d, (1, attn_dim)),
                'v_w': lin(ks[2], attn_dim, (1, attn_dim)),
                'v_b': lin(ks[3], attn_dim, (1, 1))}
    return {}  # 'dot' has no parameters


if __name__ == "__main__":
    QUERY_DIM = VALUE_DIM = 32
    ATTN_DIM = 32

    key = jax.random.PRNGKey(0)
    k_dec, k_enc, k_par = jax.random.split(key, 3)
    variant_keys = jax.random.split(k_par, 4)

    # (L, B, max_tile_l): second config exercises multi-tile L + masked tail tile.
    for (L, B, tile_l) in ((8, 2, 512), (300, 2, 128)):
        dec_hidden = jax.random.normal(k_dec, (B, QUERY_DIM), jnp.float32)
        enc_outputs = jax.random.normal(k_enc, (L, B, VALUE_DIM), jnp.float32)

        for i, name in enumerate(('add', 'dot', 'general', 'concat')):
            params = init_params(variant_keys[i], name, QUERY_DIM, VALUE_DIM, ATTN_DIM)
            context, align = jax.block_until_ready(
                attention_forward(name, dec_hidden, enc_outputs, params,
                                  max_tile_l=tile_l))
            ref_ctx, ref_align = reference(name, dec_hidden, enc_outputs, params)
            assert context.shape == (B, 1, VALUE_DIM), (name, L)
            assert align.shape == (B, L), (name, L)
            # approx reciprocal (EUP) loosens accuracy to ~1e-3 relative.
            assert jnp.allclose(align, ref_align, atol=2e-3, rtol=2e-3), (name, L)
            assert jnp.allclose(context, ref_ctx, atol=2e-3, rtol=2e-3), (name, L)

    print("KERNEL_OK")
</pallas_src>

<mosaic_0001>
module attributes {stable_mosaic.version = 11 : i64} {
  func.func @_mlp_attn_kernel(%arg0: i32, %arg1: i32, %arg2: memref<1x1x32xf32, #tpu.memory_space<vmem>>, %arg3: memref<8x1x1x32xf32, #tpu.memory_space<vmem>>, %arg4: memref<32x32xf32, #tpu.memory_space<vmem>>, %arg5: memref<32x32xf32, #tpu.memory_space<vmem>>, %arg6: memref<1x32xf32, #tpu.memory_space<vmem>>, %arg7: memref<1x32xf32, #tpu.memory_space<vmem>>, %arg8: memref<1x1x8xf32, #tpu.memory_space<vmem>>, %arg9: memref<1x1x32xf32, #tpu.memory_space<vmem>>, %arg10: memref<1x32xf32, #tpu.memory_space<vmem>>, %arg11: memref<1x1xf32, #tpu.memory_space<vmem>>, %arg12: memref<1x1xf32, #tpu.memory_space<vmem>>, %arg13: memref<1x32xf32, #tpu.memory_space<vmem>>) attributes {dimension_semantics = [#tpu.dimension_semantics<parallel>, #tpu.dimension_semantics<arbitrary>], iteration_bounds = array<i64: 2, 1>, scalar_prefetch = 0 : i64, scratch_operands = 4 : i64, tpu.core_type = #tpu.core_type<tc>, window_params = [{transform_indices = @transform_0, window_bounds = array<i64: 1, 1, 32>}, {transform_indices = @transform_1, window_bounds = array<i64: 8, 1, 1, 32>}, {pipeline_mode = #tpu.pipeline_mode<synchronous>, transform_indices = @transform_2, window_bounds = array<i64: 32, 32>}, {pipeline_mode = #tpu.pipeline_mode<synchronous>, transform_indices = @transform_3, window_bounds = array<i64: 32, 32>}, {pipeline_mode = #tpu.pipeline_mode<synchronous>, transform_indices = @transform_4, window_bounds = array<i64: 1, 32>}, {pipeline_mode = #tpu.pipeline_mode<synchronous>, transform_indices = @transform_5, window_bounds = array<i64: 1, 32>}, {transform_indices = @transform_6, window_bounds = array<i64: 1, 1, 8>}, {transform_indices = @transform_7, window_bounds = array<i64: 1, 1, 32>}]} {
    %c0_i32 = arith.constant 0 : i32
    %0 = arith.cmpi eq, %arg1, %c0_i32 : i32
    %1 = arith.extui %0 : i1 to i32
    %c0_i32_0 = arith.constant 0 : i32
    %2 = arith.cmpi ne, %1, %c0_i32_0 : i32
    scf.if %2 {
      %cst_30 = arith.constant 0xFF800000 : f32
      %42 = vector.broadcast %cst_30 : f32 to vector<1x1xf32>
      %c0_31 = arith.constant 0 : index
      %c0_32 = arith.constant 0 : index
      %43 = vector.load %arg11[%c0_31, %c0_32] : memref<1x1xf32, #tpu.memory_space<vmem>>, vector<1x1xf32>
      tpu.vector_store %arg11[%c0_31, %c0_32], %42 {strides = array<i32>} : memref<1x1xf32, #tpu.memory_space<vmem>>, vector<1x1xf32>,
      %cst_33 = arith.constant 0.000000e+00 : f32
      %44 = vector.broadcast %cst_33 : f32 to vector<1x1xf32>
      %c0_34 = arith.constant 0 : index
      %c0_35 = arith.constant 0 : index
      %45 = vector.load %arg12[%c0_34, %c0_35] : memref<1x1xf32, #tpu.memory_space<vmem>>, vector<1x1xf32>
      tpu.vector_store %arg12[%c0_34, %c0_35], %44 {strides = array<i32>} : memref<1x1xf32, #tpu.memory_space<vmem>>, vector<1x1xf32>,
      %cst_36 = arith.constant 0.000000e+00 : f32
      %46 = vector.broadcast %cst_36 : f32 to vector<1x32xf32>
      %c0_37 = arith.constant 0 : index
      %c0_38 = arith.constant 0 : index
      %47 = vector.load %arg13[%c0_37, %c0_38] : memref<1x32xf32, #tpu.memory_space<vmem>>, vector<1x32xf32>
      tpu.vector_store %arg13[%c0_37, %c0_38], %46 {strides = array<i32>} : memref<1x32xf32, #tpu.memory_space<vmem>>, vector<1x32xf32>,
      %c0_39 = arith.constant 0 : index
      %c0_40 = arith.constant 0 : index
      %c0_41 = arith.constant 0 : index
      %48 = vector.load %arg2[%c0_39, %c0_40, %c0_41] : memref<1x1x32xf32, #tpu.memory_space<vmem>>, vector<1x1x32xf32>
      %49 = vector.shape_cast %48 : vector<1x1x32xf32> to vector<1x32xf32>
      %c0_42 = arith.constant 0 : index
      %c0_43 = arith.constant 0 : index
      %50 = vector.load %arg4[%c0_42, %c0_43] : memref<32x32xf32, #tpu.memory_space<vmem>>, vector<32x32xf32>
      %cst_44 = arith.constant dense<0.000000e+00> : vector<1x32xf32>
      %51 = tpu.matmul %49, %50, %cst_44 {dimension_numbers = #tpu.dot_dimension_numbers<[1], [0], [0], [1], [0, 0, 1, 1], [], []>} : vector<1x32xf32>, vector<32x32xf32>, vector<1x32xf32> -> vector<1x32xf32>
      %c0_45 = arith.constant 0 : index
      %c0_46 = arith.constant 0 : index
      %52 = vector.load %arg6[%c0_45, %c0_46] : memref<1x32xf32, #tpu.memory_space<vmem>>, vector<1x32xf32>
      %53 = arith.addf %51, %52 : vector<1x32xf32>
      %c0_47 = arith.constant 0 : index
      %c0_48 = arith.constant 0 : index
      %54 = vector.load %arg10[%c0_47, %c0_48] : memref<1x32xf32, #tpu.memory_space<vmem>>, vector<1x32xf32>
      tpu.vector_store %arg10[%c0_47, %c0_48], %53 {strides = array<i32>} : memref<1x32xf32, #tpu.memory_space<vmem>>, vector<1x32xf32>,
    } else {
    }
    %c0 = arith.constant 0 : index
    %c0_1 = arith.constant 0 : index
    %c0_2 = arith.constant 0 : index
    %c0_3 = arith.constant 0 : index
    %3 = vector.load %arg3[%c0, %c0_1, %c0_2, %c0_3] : memref<8x1x1x32xf32, #tpu.memory_space<vmem>>, vector<8x1x1x32xf32>
    %4 = vector.shape_cast %3 : vector<8x1x1x32xf32> to vector<8x32xf32>
    %c0_4 = arith.constant 0 : index
    %c0_5 = arith.constant 0 : index
    %5 = vector.load %arg5[%c0_4, %c0_5] : memref<32x32xf32, #tpu.memory_space<vmem>>, vector<32x32xf32>
    %cst = arith.constant dense<0.000000e+00> : vector<8x32xf32>
    %6 = tpu.matmul %4, %5, %cst {dimension_numbers = #tpu.dot_dimension_numbers<[1], [0], [0], [1], [0, 0, 1, 1], [], []>} : vector<8x32xf32>, vector<32x32xf32>, vector<8x32xf32> -> vector<8x32xf32>
    %c0_6 = arith.constant 0 : index
    %c0_7 = arith.constant 0 : index
    %7 = vector.load %arg10[%c0_6, %c0_7] : memref<1x32xf32, #tpu.memory_space<vmem>>, vector<1x32xf32>
    %8 = vector.broadcast %7 : vector<1x32xf32> to vector<8x32xf32>
    %9 = arith.addf %6, %8 : vector<8x32xf32>
    %10 = math.tanh %9 : vector<8x32xf32>
    %c0_8 = arith.constant 0 : index
    %c0_9 = arith.constant 0 : index
    %11 = vector.load %arg7[%c0_8, %c0_9] : memref<1x32xf32, #tpu.memory_space<vmem>>, vector<1x32xf32>
    %cst_10 = arith.constant dense<0.000000e+00> : vector<1x8xf32>
    %12 = tpu.matmul %11, %10, %cst_10 {dimension_numbers = #tpu.dot_dimension_numbers<[1], [1], [0], [0], [0, 0, 1, 0], [], []>} : vector<1x32xf32>, vector<8x32xf32>, vector<1x8xf32> -> vector<1x8xf32>
    %c0_11 = arith.constant 0 : index
    %c0_12 = arith.constant 0 : index
    %13 = vector.load %arg11[%c0_11, %c0_12] : memref<1x1xf32, #tpu.memory_space<vmem>>, vector<1x1xf32>
    %cst_13 = arith.constant dense<0xFF800000> : vector<1xf32>
    %14 = vector.multi_reduction <maximumf>, %12, %cst_13 [1] : vector<1x8xf32> to vector<1xf32>
    %15 = vector.shape_cast %14 : vector<1xf32> to vector<1x1xf32>
    %16 = arith.maximumf %13, %15 : vector<1x1xf32>
    %17 = arith.subf %13, %16 : vector<1x1xf32>
    %18 = math.exp %17 : vector<1x1xf32>
    %19 = vector.broadcast %16 : vector<1x1xf32> to vector<1x8xf32>
    %20 = arith.subf %12, %19 : vector<1x8xf32>
    %21 = math.exp %20 : vector<1x8xf32>
    %c0_14 = arith.constant 0 : index
    %c0_15 = arith.constant 0 : index
    %22 = vector.load %arg12[%c0_14, %c0_15] : memref<1x1xf32, #tpu.memory_space<vmem>>, vector<1x1xf32>
    %23 = arith.mulf %18, %22 : vector<1x1xf32>
    %cst_16 = arith.constant dense<0.000000e+00> : vector<1xf32>
    %24 = vector.multi_reduction <add>, %21, %cst_16 [1] : vector<1x8xf32> to vector<1xf32>
    %25 = vector.shape_cast %24 : vector<1xf32> to vector<1x1xf32>
    %26 = arith.addf %23, %25 : vector<1x1xf32>
    %c0_17 = arith.constant 0 : index
    %c0_18 = arith.constant 0 : index
    %27 = vector.load %arg12[%c0_17, %c0_18] : memref<1x1xf32, #tpu.memory_space<vmem>>, vector<1x1xf32>
    tpu.vector_store %arg12[%c0_17, %c0_18], %26 {strides = array<i32>} : memref<1x1xf32, #tpu.memory_space<vmem>>, vector<1x1xf32>,
    %c0_19 = arith.constant 0 : index
    %c0_20 = arith.constant 0 : index
    %28 = vector.load %arg13[%c0_19, %c0_20] : memref<1x32xf32, #tpu.memory_space<vmem>>, vector<1x32xf32>
    %29 = vector.broadcast %18 : vector<1x1xf32> to vector<1x32xf32>
    %30 = arith.mulf %29, %28 : vector<1x32xf32>
    %cst_21 = arith.constant dense<0.000000e+00> : vector<1x32xf32>
    %31 = tpu.matmul %21, %4, %cst_21 {dimension_numbers = #tpu.dot_dimension_numbers<[1], [0], [0], [1], [0, 0, 1, 1], [], []>} : vector<1x8xf32>, vector<8x32xf32>, vector<1x32xf32> -> vector<1x32xf32>
    %32 = arith.addf %30, %31 : vector<1x32xf32>
    %c0_22 = arith.constant 0 : index
    %c0_23 = arith.constant 0 : index
    %33 = vector.load %arg13[%c0_22, %c0_23] : memref<1x32xf32, #tpu.memory_space<vmem>>, vector<1x32xf32>
    tpu.vector_store %arg13[%c0_22, %c0_23], %32 {strides = array<i32>} : memref<1x32xf32, #tpu.memory_space<vmem>>, vector<1x32xf32>,
    %c0_24 = arith.constant 0 : index
    %c0_25 = arith.constant 0 : index
    %34 = vector.load %arg11[%c0_24, %c0_25] : memref<1x1xf32, #tpu.memory_space<vmem>>, vector<1x1xf32>
    tpu.vector_store %arg11[%c0_24, %c0_25], %16 {strides = array<i32>} : memref<1x1xf32, #tpu.memory_space<vmem>>, vector<1x1xf32>,
    %c0_26 = arith.constant 0 : index
    %35 = arith.index_cast %arg1 : i32 to index
    %c0_27 = arith.constant 0 : index
    %36 = vector.load %arg8[%c0_26, %35, %c0_27] : memref<1x1x8xf32, #tpu.memory_space<vmem>>, vector<1x1x8xf32>
    %37 = vector.shape_cast %36 : vector<1x1x8xf32> to vector<1x8xf32>
    %38 = vector.shape_cast %12 : vector<1x8xf32> to vector<1x1x8xf32>
    tpu.vector_store %arg8[%c0_26, %35, %c0_27], %38 {strides = array<i32>} : memref<1x1x8xf32, #tpu.memory_space<vmem>>, vector<1x1x8xf32>,
    %c0_i32_28 = arith.constant 0 : i32
    %39 = arith.cmpi eq, %arg1, %c0_i32_28 : i32
    %40 = arith.extui %39 : i1 to i32
    %c0_i32_29 = arith.constant 0 : i32
    %41 = arith.cmpi ne, %40, %c0_i32_29 : i32
    scf.if %41 {
      %c0_30 = arith.constant 0 : index
      %c0_31 = arith.constant 0 : index
      %42 = vector.load %arg12[%c0_30, %c0_31] : memref<1x1xf32, #tpu.memory_space<vmem>>, vector<1x1xf32>
      %43 = tpu.reciprocal %42 {approx = true} : vector<1x1xf32> -> vector<1x1xf32>
      %c0_32 = arith.constant 0 : index
      %c0_33 = arith.constant 0 : index
      %c0_34 = arith.constant 0 : index
      %44 = vector.load %arg8[%c0_32, %c0_33, %c0_34] : memref<1x1x8xf32, #tpu.memory_space<vmem>>, vector<1x1x8xf32>
      %45 = vector.shape_cast %44 : vector<1x1x8xf32> to vector<1x8xf32>
      %c0_35 = arith.constant 0 : index
      %c0_36 = arith.constant 0 : index
      %46 = vector.load %arg11[%c0_35, %c0_36] : memref<1x1xf32, #tpu.memory_space<vmem>>, vector<1x1xf32>
      %47 = vector.broadcast %46 : vector<1x1xf32> to vector<1x8xf32>
      %48 = arith.subf %45, %47 : vector<1x8xf32>
      %49 = math.exp %48 : vector<1x8xf32>
      %50 = vector.broadcast %43 : vector<1x1xf32> to vector<1x8xf32>
      %51 = arith.mulf %49, %50 : vector<1x8xf32>
      %c0_37 = arith.constant 0 : index
      %c0_38 = arith.constant 0 : index
      %c0_39 = arith.constant 0 : index
      %52 = vector.load %arg8[%c0_37, %c0_38, %c0_39] : memref<1x1x8xf32, #tpu.memory_space<vmem>>, vector<1x1x8xf32>
      %53 = vector.shape_cast %52 : vector<1x1x8xf32> to vector<1x8xf32>
      %54 = vector.shape_cast %51 : vector<1x8xf32> to vector<1x1x8xf32>
      tpu.vector_store %arg8[%c0_37, %c0_38, %c0_39], %54 {strides = array<i32>} : memref<1x1x8xf32, #tpu.memory_space<vmem>>, vector<1x1x8xf32>,
      %c0_40 = arith.constant 0 : index
      %c0_41 = arith.constant 0 : index
      %55 = vector.load %arg13[%c0_40, %c0_41] : memref<1x32xf32, #tpu.memory_space<vmem>>, vector<1x32xf32>
      %56 = vector.broadcast %43 : vector<1x1xf32> to vector<1x32xf32>
      %57 = arith.mulf %55, %56 : vector<1x32xf32>
      %c0_42 = arith.constant 0 : index
      %c0_43 = arith.constant 0 : index
      %c0_44 = arith.constant 0 : index
      %58 = vector.load %arg9[%c0_42, %c0_43, %c0_44] : memref<1x1x32xf32, #tpu.memory_space<vmem>>, vector<1x1x32xf32>
      %59 = vector.shape_cast %58 : vector<1x1x32xf32> to vector<1x32xf32>
      %60 = vector.shape_cast %57 : vector<1x32xf32> to vector<1x1x32xf32>
      tpu.vector_store %arg9[%c0_42, %c0_43, %c0_44], %60 {strides = array<i32>} : memref<1x1x32xf32, #tpu.memory_space<vmem>>, vector<1x1x32xf32>,
    } else {
    }
    return
  }
  func.func @transform_0(%arg0: i32, %arg1: i32) -> (i32, i32, i32) {
    %c0_i32 = arith.constant 0 : i32
    %c0_i32_0 = arith.constant 0 : i32
    %c0_i32_1 = arith.constant 0 : i32
    return %arg0, %c0_i32, %c0_i32_0 : i32, i32, i32
  }
  func.func @transform_1(%arg0: i32, %arg1: i32) -> (i32, i32, i32, i32) {
    %c0_i32 = arith.constant 0 : i32
    %c0_i32_0 = arith.constant 0 : i32
    %c0_i32_1 = arith.constant 0 : i32
    return %arg1, %arg0, %c0_i32, %c0_i32_0 : i32, i32, i32, i32
  }
  func.func @transform_2(%arg0: i32, %arg1: i32) -> (i32, i32) {
    %c0_i32 = arith.constant 0 : i32
    %c0_i32_0 = arith.constant 0 : i32
    %c0_i32_1 = arith.constant 0 : i32
    return %c0_i32, %c0_i32_0 : i32, i32
  }
  func.func @transform_3(%arg0: i32, %arg1: i32) -> (i32, i32) {
    %c0_i32 = arith.constant 0 : i32
    %c0_i32_0 = arith.constant 0 : i32
    %c0_i32_1 = arith.constant 0 : i32
    return %c0_i32, %c0_i32_0 : i32, i32
  }
  func.func @transform_4(%arg0: i32, %arg1: i32) -> (i32, i32) {
    %c0_i32 = arith.constant 0 : i32
    %c0_i32_0 = arith.constant 0 : i32
    %c0_i32_1 = arith.constant 0 : i32
    return %c0_i32, %c0_i32_0 : i32, i32
  }
  func.func @transform_5(%arg0: i32, %arg1: i32) -> (i32, i32) {
    %c0_i32 = arith.constant 0 : i32
    %c0_i32_0 = arith.constant 0 : i32
    %c0_i32_1 = arith.constant 0 : i32
    return %c0_i32, %c0_i32_0 : i32, i32
  }
  func.func @transform_6(%arg0: i32, %arg1: i32) -> (i32, i32, i32) {
    %c0_i32 = arith.constant 0 : i32
    %c0_i32_0 = arith.constant 0 : i32
    %c0_i32_1 = arith.constant 0 : i32
    return %arg0, %c0_i32, %c0_i32_0 : i32, i32, i32
  }
  func.func @transform_7(%arg0: i32, %arg1: i32) -> (i32, i32, i32) {
    %c0_i32 = arith.constant 0 : i32
    %c0_i32_0 = arith.constant 0 : i32
    %c0_i32_1 = arith.constant 0 : i32
    return %arg0, %c0_i32, %c0_i32_0 : i32, i32, i32
  }
}

</mosaic_0001>

<llo_original>
// kernel: tpu_custom_call.1
$region0: #{tpu_custom_call.1}
  #allocation0 [shape = 'u32[]', space=smem, size = 0x4, offset = 0x4, fixed_abs, tag = 'smem constant byte address 0x4 - core index']
  #allocation1 [shape = 'u32[144,128]{1,0:T(1,128)}', space=vmem, size = 0x12000, scoped, tag = 'internal scratch']
  #allocation2 [shape = 'f32[1,32]{1,0:T(1,128)}', space=vmem, size = 0x200, scoped, tag = 'scratch operand']
  #allocation3 [shape = 'f32[1,1]{1,0:T(1,128)}', space=vmem, size = 0x200, scoped, tag = 'scratch operand']
  #allocation4 [shape = 'f32[1,1]{1,0:T(1,128)}', space=vmem, size = 0x200, scoped, tag = 'scratch operand']
  #allocation5 [shape = 'f32[1,32]{1,0:T(1,128)}', space=vmem, size = 0x200, scoped, tag = 'scratch operand']
  %s0 = inlined_call_operand.hbm [shape: f32[2,1,32], index: 0, kind: input, shape index: {}]
  %s1 = inlined_call_operand.hbm [shape: f32[8,2,1,32], index: 1, kind: input, shape index: {}]
  %s2 = inlined_call_operand.hbm [shape: f32[32,32], index: 2, kind: input, shape index: {}]
  %s3 = inlined_call_operand.hbm [shape: f32[32,32], index: 3, kind: input, shape index: {}]
  %s4 = inlined_call_operand.vmem [shape: f32[1,32], index: 4, kind: input, shape index: {}]
  %s5 = inlined_call_operand.vmem [shape: f32[1,32], index: 5, kind: input, shape index: {}]
  %s6 = inlined_call_operand.hbm [shape: f32[2,1,8], index: 6, kind: output, shape index: {0}]
  %s7 = inlined_call_operand.hbm [shape: f32[2,1,32], index: 7, kind: output, shape index: {1}]
  %8 = xla_tuple %s6, %s7
  %s9 = sld [smem:[#allocation0]]
  $region89: #{tpu_custom_call.1} parent=0
    _
  %s11 = ssub.s32 1, %s9
  %s12 = scalar_select 0, %s11, %s9
  $region1: #{tpu_custom_call.1} parent=0
    #allocation6 [shape = 'u8[1024]{0}', space=vmem, size = 0x400, scoped, tag = 'input window, operand 0']
    #allocation7 [shape = 's32[2]{0}', space=sflag, size = 0x8, scoped, tag = 'scoped memory for tpu_custom_call.1']
    #allocation8 [shape = 's32[2]{0}', space=sflag, size = 0x8, scoped, tag = 'scoped memory for tpu_custom_call.1']
    #allocation9 [shape = 'u8[8192]{0}', space=vmem, size = 0x2000, scoped, tag = 'input window, operand 1']
    #allocation10 [shape = 's32[2]{0}', space=sflag, size = 0x8, scoped, tag = 'scoped memory for tpu_custom_call.1']
    #allocation11 [shape = 'u8[16384]{0}', space=vmem, size = 0x4000, scoped, tag = 'input window, operand 2, single buffered']
    #allocation12 [shape = 'u8[16384]{0}', space=vmem, size = 0x4000, scoped, tag = 'input window, operand 3, single buffered']
    #allocation13 [shape = 's32[1]{0}', space=sflag, size = 0x4, scoped, tag = 'scoped memory for tpu_custom_call.1']
    #allocation14 [shape = 'u8[1024]{0}', space=vmem, size = 0x400, scoped, tag = 'output window, operand 0']
    #allocation15 [shape = 'u8[1024]{0}', space=vmem, size = 0x400, scoped, tag = 'output window, operand 1']
    #allocation16 [shape = 's32[2]{0}', space=sflag, size = 0x8, scoped, tag = 'scoped memory for tpu_custom_call.1']
    %13 = vsyncpa [#allocation7], 0
    %s14 = scalar_lea.sflag [#allocation7], 1
    %15 = vsyncpa %s14, 0
    %16 = vsyncpa [#allocation10], 0
    %s17 = scalar_lea.sflag [#allocation10], 1
    %18 = vsyncpa %s17, 0
    %19 = vsyncpa [#allocation13], 0
    %20 = vsyncpa [#allocation8], 0
    %s21 = scalar_lea.sflag [#allocation8], 1
    %22 = vsyncpa %s21, 0
    %23 = vsyncpa [#allocation16], 0
    %s24 = scalar_lea.sflag [#allocation16], 1
    %25 = vsyncpa %s24, 0
    loop: start=0, step=1, limit=4
    $region2: #{tpu_custom_call.1} parent=1 // loop_pre_header
      _
    $region3: #{tpu_custom_call.1} parent=1 // loop_header
      %s27 = sphi 0, %s31
      %p28 = scmp.ge.s32.totalorder %s27, 4
      %s34 = sphi 0, %s46
      %s35 = sphi 0, %s42
      %s36 = sphi 0, %s34
      %s37 = sphi 0, %s35
      %s38 = sphi 0, %s36
      %s39 = sphi 0, %s37
      %s49 = sphi 0, %s51
      %s52 = sphi 0, %s49
      %s53 = sphi 0, %s52
      %s69 = sphi 0, %s53
      %s77 = sphi 0, %s79
      %s80 = sphi 0, %s77
      %s81 = sphi 0, %s80
      %s97 = sphi 0, %s81
      %s101 = sphi 0, %s101
      %s103 = sphi 0, %s101
      %s104 = sphi 0, %s103
      %s118 = sphi 0, %s104
      %s122 = sphi 0, %s122
      %s124 = sphi 0, %s122
      %s125 = sphi 0, %s124
      %s139 = sphi 0, %s125
      %s143 = sphi 0, %s143
      %s145 = sphi 0, %s143
      %s146 = sphi 0, %s145
      %s160 = sphi 0, %s146
      %s164 = sphi 0, %s164
      %s166 = sphi 0, %s164
      %s167 = sphi 0, %s166
      %s181 = sphi 0, %s167
      %s187 = sphi 0, %s189
      %s190 = sphi 0, %s187
      %s191 = sphi 0, %s190
      %s207 = sphi 0, %s191
      %s213 = sphi 0, %s215
      %s216 = sphi 0, %s213
      %s217 = sphi 0, %s216
      %s233 = sphi 0, %s217
    $region4: #{tpu_custom_call.1} parent=1 // loop_header_branch
      %30 = sbr.rel (%p28) target = $region8
    $region5: #{tpu_custom_call.1} parent=1 // loop_body
      %s32 = ssub.s32 %s27, 1
      %s33 = ssub.s32 %s27, 2
      %s40 = sadd.s32 1, %s35
      %p41 = scmp.ge.s32.totalorder %s40, 1
      %s42 = scalar_select %p41, 0, %s40
      %s43 = sadd.s32 1, %s34
      %s44 = scalar_select %p41, %s43, %s34
      %p45 = scmp.ge.s32.totalorder %s44, 2
      %s46 = scalar_select %p45, 0, %s44
      %s47 = ssub.s32 %s34, %s46
      %p48 = scmp.eq.s32.totalorder %s47, 0
      %s50 = sadd.s32 %s49, 1
      %s51 = scalar_select %p48, %s49, %s50
      %p54 = pneg %p48
      %p55 = scmp.eq.s32.totalorder %s27, 1
      %p56 = por %p54, %p55
      %p57 = scmp.ne.s32.totalorder %s49, %s52
      %p58 = scmp.eq.s32.totalorder %s27, 0
      %p59 = por %p57, %p58
      %p60 = scmp.ne.s32.totalorder %s49, %s52
      %p61 = scmp.eq.s32.totalorder %s32, 1
      %p62 = por %p60, %p61
      %p63 = scmp.ne.s32.totalorder %s52, %s53
      %p64 = scmp.eq.s32.totalorder %s32, 0
      %p65 = por %p63, %p64
      %p66 = scmp.ne.s32.totalorder %s52, %s53
      %p67 = scmp.eq.s32.totalorder %s33, 1
      %p68 = por %p66, %p67
      %p70 = scmp.ne.s32.totalorder %s53, %s69
      %p71 = scmp.eq.s32.totalorder %s33, 0
      %p72 = por %p70, %p71
      %s73 = ssub.s32 %s35, %s42
      %s74 = ssub.s32 %s34, %s46
      %s75 = sor.u32 %s73, %s74
      %p76 = scmp.eq.s32.totalorder %s75, 0
      %s78 = sadd.s32 %s77, 1
      %s79 = scalar_select %p76, %s77, %s78
      %p82 = pneg %p76
      %p83 = scmp.eq.s32.totalorder %s27, 1
      %p84 = por %p82, %p83
      %p85 = scmp.ne.s32.totalorder %s77, %s80
      %p86 = scmp.eq.s32.totalorder %s27, 0
      %p87 = por %p85, %p86
      %p88 = scmp.ne.s32.totalorder %s77, %s80
      %p89 = scmp.eq.s32.totalorder %s32, 1
      %p90 = por %p88, %p89
      %p91 = scmp.ne.s32.totalorder %s80, %s81
      %p92 = scmp.eq.s32.totalorder %s32, 0
      %p93 = por %p91, %p92
      %p94 = scmp.ne.s32.totalorder %s80, %s81
      %p95 = scmp.eq.s32.totalorder %s33, 1
      %p96 = por %p94, %p95
      %p98 = scmp.ne.s32.totalorder %s81, %s97
      %p99 = scmp.eq.s32.totalorder %s33, 0
      %p100 = por %p98, %p99
      %s102 = sadd.s32 %s101, 1
      %p105 = scmp.eq.s32.totalorder %s27, 1
      %p106 = scmp.ne.s32.totalorder %s101, %s103
      %p107 = scmp.eq.s32.totalorder %s27, 0
      %p108 = por %p106, %p107
      %p109 = scmp.ne.s32.totalorder %s101, %s103
      %p110 = scmp.eq.s32.totalorder %s32, 1
      %p111 = por %p109, %p110
      %p112 = scmp.ne.s32.totalorder %s103, %s104
      %p113 = scmp.eq.s32.totalorder %s32, 0
      %p114 = por %p112, %p113
      %p115 = scmp.ne.s32.totalorder %s103, %s104
      %p116 = scmp.eq.s32.totalorder %s33, 1
      %p117 = por %p115, %p116
      %p119 = scmp.ne.s32.totalorder %s104, %s118
      %p120 = scmp.eq.s32.totalorder %s33, 0
      %p121 = por %p119, %p120
      %s123 = sadd.s32 %s122, 1
      %p126 = scmp.eq.s32.totalorder %s27, 1
      %p127 = scmp.ne.s32.totalorder %s122, %s124
      %p128 = scmp.eq.s32.totalorder %s27, 0
      %p129 = por %p127, %p128
      %p130 = scmp.ne.s32.totalorder %s122, %s124
      %p131 = scmp.eq.s32.totalorder %s32, 1
      %p132 = por %p130, %p131
      %p133 = scmp.ne.s32.totalorder %s124, %s125
      %p134 = scmp.eq.s32.totalorder %s32, 0
      %p135 = por %p133, %p134
      %p136 = scmp.ne.s32.totalorder %s124, %s125
      %p137 = scmp.eq.s32.totalorder %s33, 1
      %p138 = por %p136, %p137
      %p140 = scmp.ne.s32.totalorder %s125, %s139
      %p141 = scmp.eq.s32.totalorder %s33, 0
      %p142 = por %p140, %p141
      %s144 = sadd.s32 %s143, 1
      %p147 = scmp.eq.s32.totalorder %s27, 1
      %p148 = scmp.ne.s32.totalorder %s143, %s145
      %p149 = scmp.eq.s32.totalorder %s27, 0
      %p150 = por %p148, %p149
      %p151 = scmp.ne.s32.totalorder %s143, %s145
      %p152 = scmp.eq.s32.totalorder %s32, 1
      %p153 = por %p151, %p152
      %p154 = scmp.ne.s32.totalorder %s145, %s146
      %p155 = scmp.eq.s32.totalorder %s32, 0
      %p156 = por %p154, %p155
      %p157 = scmp.ne.s32.totalorder %s145, %s146
      %p158 = scmp.eq.s32.totalorder %s33, 1
      %p159 = por %p157, %p158
      %p161 = scmp.ne.s32.totalorder %s146, %s160
      %p162 = scmp.eq.s32.totalorder %s33, 0
      %p163 = por %p161, %p162
      %s165 = sadd.s32 %s164, 1
      %p168 = scmp.eq.s32.totalorder %s27, 1
      %p169 = scmp.ne.s32.totalorder %s164, %s166
      %p170 = scmp.eq.s32.totalorder %s27, 0
      %p171 = por %p169, %p170
      %p172 = scmp.ne.s32.totalorder %s164, %s166
      %p173 = scmp.eq.s32.totalorder %s32, 1
      %p174 = por %p172, %p173
      %p175 = scmp.ne.s32.totalorder %s166, %s167
      %p176 = scmp.eq.s32.totalorder %s32, 0
      %p177 = por %p175, %p176
      %p178 = scmp.ne.s32.totalorder %s166, %s167
      %p179 = scmp.eq.s32.totalorder %s33, 1
      %p180 = por %p178, %p179
      %p182 = scmp.ne.s32.totalorder %s167, %s181
      %p183 = scmp.eq.s32.totalorder %s33, 0
      %p184 = por %p182, %p183
      %s185 = ssub.s32 %s34, %s46
      %p186 = scmp.eq.s32.totalorder %s185, 0
      %s188 = sadd.s32 %s187, 1
      %s189 = scalar_select %p186, %s187, %s188
      %p192 = pneg %p186
      %p193 = scmp.eq.s32.totalorder %s27, 1
      %p194 = por %p192, %p193
      %p195 = scmp.ne.s32.totalorder %s187, %s190
      %p196 = scmp.eq.s32.totalorder %s27, 0
      %p197 = por %p195, %p196
      %p198 = scmp.ne.s32.totalorder %s187, %s190
      %p199 = scmp.eq.s32.totalorder %s32, 1
      %p200 = por %p198, %p199
      %p201 = scmp.ne.s32.totalorder %s190, %s191
      %p202 = scmp.eq.s32.totalorder %s32, 0
      %p203 = por %p201, %p202
      %p204 = scmp.ne.s32.totalorder %s190, %s191
      %p205 = scmp.eq.s32.totalorder %s33, 1
      %p206 = por %p204, %p205
      %p208 = scmp.ne.s32.totalorder %s191, %s207
      %p209 = scmp.eq.s32.totalorder %s33, 0
      %p210 = por %p208, %p209
      %s211 = ssub.s32 %s34, %s46
      %p212 = scmp.eq.s32.totalorder %s211, 0
      %s214 = sadd.s32 %s213, 1
      %s215 = scalar_select %p212, %s213, %s214
      %p218 = pneg %p212
      %p219 = scmp.eq.s32.totalorder %s27, 1
      %p220 = por %p218, %p219
      %p221 = scmp.ne.s32.totalorder %s213, %s216
      %p222 = scmp.eq.s32.totalorder %s27, 0
      %p223 = por %p221, %p222
      %p224 = scmp.ne.s32.totalorder %s213, %s216
      %p225 = scmp.eq.s32.totalorder %s32, 1
      %p226 = por %p224, %p225
      %p227 = scmp.ne.s32.totalorder %s216, %s217
      %p228 = scmp.eq.s32.totalorder %s32, 0
      %p229 = por %p227, %p228
      %p230 = scmp.ne.s32.totalorder %s216, %s217
      %p231 = scmp.eq.s32.totalorder %s33, 1
      %p232 = por %p230, %p231
      %p234 = scmp.ne.s32.totalorder %s217, %s233
      %p235 = scmp.eq.s32.totalorder %s33, 0
      %p236 = por %p234, %p235
      %p237 = scmp.le.s32.totalorder 1, %s27
      %p238 = scmp.lt.s32.totalorder %s27, 3
      %p239 = pnand %p237, %p238
      %p240 = pneg %p239
      // Predicated region
      $region9: #{tpu_custom_call.1} parent=5 // pred_check
        _
      $region10: #{tpu_custom_call.1} parent=5 // pred_check_branch
        %242 = sbr.rel (%p239) target = $region12
      $region11: #{tpu_custom_call.1} parent=5 // pred_region
        %s243 = ssub.s32 %s27, 1
        // Predicated region
        $region13: #{tpu_custom_call.1} parent=11 // pred_check
          %p244 = pneg %p114
        $region14: #{tpu_custom_call.1} parent=11 // pred_check_branch
          %246 = sbr.rel (%p244) target = $region16
        $region15: #{tpu_custom_call.1} parent=11 // pred_region
          %s248 = ssub.s32 512, 512
          %249 = vsyncadd [#allocation10], %s248
          %s250 = sshll.u32 [#allocation11], 4
          %s251 = int_to_ptr.vmem [resolvable:$true] %s250
          %256 = dma.hbm_to_vmem [thread:$0]  %s2, 512, %s251, [#allocation10], 128, 128, 8
        $region16: #{tpu_custom_call.1} parent=11 // pred_fallthru
          _
        // Predicated region
        $region17: #{tpu_custom_call.1} parent=11 // pred_check
          %p257 = pneg %p135
        $region18: #{tpu_custom_call.1} parent=11 // pred_check_branch
          %259 = sbr.rel (%p257) target = $region20
        $region19: #{tpu_custom_call.1} parent=11 // pred_region
          %s261 = ssub.s32 512, 512
          %262 = vsyncadd [#allocation13], %s261
          %s263 = sshll.u32 [#allocation12], 4
          %s264 = int_to_ptr.vmem [resolvable:$true] %s263
          %269 = dma.hbm_to_vmem [thread:$0]  %s3, 512, %s264, [#allocation13], 128, 128, 8
        $region20: #{tpu_custom_call.1} parent=11 // pred_fallthru
          _
        // Predicated region
        $region21: #{tpu_custom_call.1} parent=11 // pred_check
          %p270 = pneg %p156
        $region22: #{tpu_custom_call.1} parent=11 // pred_check_branch
          %272 = sbr.rel (%p270) target = $region24
        $region23: #{tpu_custom_call.1} parent=11 // pred_region
          _
        $region24: #{tpu_custom_call.1} parent=11 // pred_fallthru
          _
        // Predicated region
        $region25: #{tpu_custom_call.1} parent=11 // pred_check
          %p273 = pneg %p177
        $region26: #{tpu_custom_call.1} parent=11 // pred_check_branch
          %275 = sbr.rel (%p273) target = $region28
        $region27: #{tpu_custom_call.1} parent=11 // pred_region
          _
        $region28: #{tpu_custom_call.1} parent=11 // pred_fallthru
          _
      $region12: #{tpu_custom_call.1} parent=5 // pred_fallthru
        _
      %p276 = scmp.lt.s32.totalorder %s27, 2
      // Predicated region
      $region29: #{tpu_custom_call.1} parent=5 // pred_check
        %p277 = pneg %p276
      $region30: #{tpu_custom_call.1} parent=5 // pred_check_branch
        %279 = sbr.rel (%p277) target = $region32
      $region31: #{tpu_custom_call.1} parent=5 // pred_region
        // Predicated region
        $region33: #{tpu_custom_call.1} parent=31 // pred_check
          %p280 = pneg %p59
        $region34: #{tpu_custom_call.1} parent=31 // pred_check_branch
          %282 = sbr.rel (%p280) target = $region36
        $region35: #{tpu_custom_call.1} parent=31 // pred_region
          %s283 = sand.u32 %s49, 1
          %s284 = scalar_lea.sflag [#allocation7], %s283
          %s285 = sand.u32 %s49, 1
          %s286 = scalar_lea.vmem [#allocation6], %s285
          %s288 = ssub.s32 16, 16
          %289 = vsyncadd %s284, %s288
          %s290 = smul.addr %s34, 16
          %s291 = scalar_lea.hbm %s0, %s290
          %s293 = sshll.u32 %s286, 4
          %s294 = int_to_ptr.vmem [resolvable:$true] %s293
          %296 = dma.hbm_to_vmem [thread:$0]  %s291, 16, %s294, %s284
        $region36: #{tpu_custom_call.1} parent=31 // pred_fallthru
          _
        // Predicated region
        $region37: #{tpu_custom_call.1} parent=31 // pred_check
          %p297 = pneg %p87
        $region38: #{tpu_custom_call.1} parent=31 // pred_check_branch
          %299 = sbr.rel (%p297) target = $region40
        $region39: #{tpu_custom_call.1} parent=31 // pred_region
          %s300 = sand.u32 %s27, 1
          %s301 = scalar_lea.sflag [#allocation10], %s300
          %s302 = sand.u32 %s77, 1
          %s303 = smul.addr %s302, 8
          %s304 = scalar_lea.vmem [#allocation9], %s303
          %s305 = smul.u32 8, %s35
          %s307 = ssub.s32 128, 128
          %308 = vsyncadd %s301, %s307
          %s309 = smul.addr %s305, 2
          %s310 = sadd.s32 %s34, %s309
          %s311 = smul.addr %s310, 16
          %s312 = scalar_lea.hbm %s1, %s311
          %s313 = sshll.u32 %s304, 4
          %s314 = int_to_ptr.vmem [resolvable:$true] %s313
          %319 = dma.hbm_to_vmem [thread:$0]  %s312, 128, %s314, %s301, 32, 16, 1
        $region40: #{tpu_custom_call.1} parent=31 // pred_fallthru
          _
      $region32: #{tpu_custom_call.1} parent=5 // pred_fallthru
        _
      %p320 = scmp.le.s32.totalorder 1, %s27
      %p321 = scmp.lt.s32.totalorder %s27, 3
      %p322 = pnand %p320, %p321
      %p323 = pneg %p322
      // Predicated region
      $region41: #{tpu_custom_call.1} parent=5 // pred_check
        _
      $region42: #{tpu_custom_call.1} parent=5 // pred_check_branch
        %325 = sbr.rel (%p322) target = $region44
      $region43: #{tpu_custom_call.1} parent=5 // pred_region
        %s326 = ssub.s32 %s27, 1
        %s327 = sand.u32 %s52, 1
        %s328 = scalar_lea.sflag [#allocation7], %s327
        %s329 = sand.u32 %s52, 1
        %s330 = scalar_lea.vmem [#allocation6], %s329
        // Predicated region
        $region45: #{tpu_custom_call.1} parent=43 // pred_check
          %p331 = pneg %p65
        $region46: #{tpu_custom_call.1} parent=43 // pred_check_branch
          %333 = sbr.rel (%p331) target = $region48
        $region47: #{tpu_custom_call.1} parent=43 // pred_region
          %334 = dma.done %s328, 16
        $region48: #{tpu_custom_call.1} parent=43 // pred_fallthru
          _
        %s335 = sand.u32 %s32, 1
        %s336 = scalar_lea.sflag [#allocation10], %s335
        %s337 = sand.u32 %s80, 1
        %s338 = smul.addr %s337, 8
        %s339 = scalar_lea.vmem [#allocation9], %s338
        // Predicated region
        $region49: #{tpu_custom_call.1} parent=43 // pred_check
          %p340 = pneg %p93
        $region50: #{tpu_custom_call.1} parent=43 // pred_check_branch
          %342 = sbr.rel (%p340) target = $region52
        $region51: #{tpu_custom_call.1} parent=43 // pred_region
          %343 = dma.done %s336, 128
        $region52: #{tpu_custom_call.1} parent=43 // pred_fallthru
          _
        // Predicated region
        $region53: #{tpu_custom_call.1} parent=43 // pred_check
          %p344 = pneg %p114
        $region54: #{tpu_custom_call.1} parent=43 // pred_check_branch
          %346 = sbr.rel (%p344) target = $region56
        $region55: #{tpu_custom_call.1} parent=43 // pred_region
          %347 = dma.done [#allocation10], 512
        $region56: #{tpu_custom_call.1} parent=43 // pred_fallthru
          _
        // Predicated region
        $region57: #{tpu_custom_call.1} parent=43 // pred_check
          %p348 = pneg %p135
        $region58: #{tpu_custom_call.1} parent=43 // pred_check_branch
          %350 = sbr.rel (%p348) target = $region60
        $region59: #{tpu_custom_call.1} parent=43 // pred_region
          %351 = dma.done [#allocation13], 512
        $region60: #{tpu_custom_call.1} parent=43 // pred_fallthru
          _
        %s352 = sand.u32 %s52, 1
        %s353 = scalar_lea.sflag [#allocation7], %s352
        %s354 = sand.u32 %s52, 1
        %s355 = scalar_lea.vmem [#allocation6], %s354
        %p356 = pneg %p65
        %p357 = pneg %p62
        %s358 = sand.u32 %s32, 1
        %s359 = scalar_lea.sflag [#allocation10], %s358
        %s360 = sand.u32 %s80, 1
        %s361 = smul.addr %s360, 8
        %s362 = scalar_lea.vmem [#allocation9], %s361
        %p363 = pneg %p93
        %p364 = pneg %p90
        %p365 = pneg %p114
        %p366 = pneg %p111
        %p367 = pneg %p135
        %p368 = pneg %p132
        %p369 = pneg %p156
        %p370 = pneg %p153
        %p371 = pneg %p177
        %p372 = pneg %p174
        %p373 = pneg %p203
        %p374 = pneg %p200
        %s375 = sand.u32 %s190, 1
        %s376 = scalar_lea.sflag [#allocation8], %s375
        %s377 = sand.u32 %s190, 1
        %s378 = scalar_lea.vmem [#allocation14], %s377
        %p379 = pneg %p229
        %p380 = pneg %p226
        %s381 = sand.u32 %s216, 1
        %s382 = scalar_lea.sflag [#allocation16], %s381
        %s383 = sand.u32 %s216, 1
        %s384 = scalar_lea.vmem [#allocation15], %s383
        %s385 = smul.u32 8, %s37
        %p386 = scmp.eq.s32.totalorder %s37, 0
        // Predicated region
        $region61: #{tpu_custom_call.1} parent=43 // pred_check
          %p387 = pneg %p386
        $region62: #{tpu_custom_call.1} parent=43 // pred_check_branch
          %389 = sbr.rel (%p387) target = $region64
        $region63: #{tpu_custom_call.1} parent=43 // pred_region
          %vm390 = vcmask 0
          %391 = vst.msk [vmem:[#allocation3] sm:$0x1] %vm390, -inf
          %392 = vst.msk [vmem:[#allocation4] sm:$0x1] %vm390, 0.0
          %vm393 = vcmask 253952
          %394 = vst.msk [vmem:[#allocation5] sm:$0x1] %vm393, 0.0
          %v395 = vld [vmem:[%s330] sm:$0x1]
          %v396 = vld [vmem:[#allocation11] sm:$0xff]
          %v397 = vld [vmem:[#allocation11 + $0x8] sm:$0xff]
          %v398 = vld [vmem:[#allocation11 + $0x10] sm:$0xff]
          %v399 = vld [vmem:[#allocation11 + $0x18] sm:$0xff]
          %v400 = vld [vmem:[%s4] sm:$0x1]
          %vm401 = vcmask 261120
          %v403 = vsel %vm401, %v395, 0
          %405 = vmatprep.subr.mxu0 0.0
          %406 = vmatpush1.msra.mxu0 %v396
          %407 = vmatprep.subr.mxu0 0.0
          %408 = vmatpush1.msra.mxu0 %v397
          %409 = vmatprep.subr.mxu0 0.0
          %410 = vmatpush1.msra.mxu0 %v398
          %411 = vmatprep.subr.mxu0 0.0
          %412 = vmatpush1.msra.mxu0 %v399
          %413 = vmatprep.subr.mxu0 0.0
          %414 = vmatpush1.msra.mxu0 0.0
          %415 = vmatprep.subr.mxu0 0.0
          %416 = vmatpush1.msra.mxu0 0.0
          %417 = vmatprep.subr.mxu0 0.0
          %418 = vmatpush1.msra.mxu0 0.0
          %419 = vmatprep.subr.mxu0 0.0
          %420 = vmatpush1.msra.mxu0 0.0
          %421 = vmatprep.subr.mxu0 0.0
          %422 = vmatpush1.msra.mxu0 0.0
          %423 = vmatprep.subr.mxu0 0.0
          %424 = vmatpush1.msra.mxu0 0.0
          %425 = vmatprep.subr.mxu0 0.0
          %426 = vmatpush1.msra.mxu0 0.0
          %427 = vmatprep.subr.mxu0 0.0
          %428 = vmatpush1.msra.mxu0 0.0
          %429 = vmatprep.subr.mxu0 0.0
          %430 = vmatpush1.msra.mxu0 0.0
          %431 = vmatprep.subr.mxu0 0.0
          %432 = vmatpush1.msra.mxu0 0.0
          %433 = vmatprep.subr.mxu0 0.0
          %434 = vmatpush1.msra.mxu0 0.0
          %435 = vmatprep.subr.mxu0 0.0
          %436 = vmatpush1.msra.mxu0 0.0
          %437 = vmatprep.subr.mxu0 0.0
          %438 = vmatpush1.msra.mxu0 0.0
          %439 = vmatprep.subr.mxu0 0.0
          %440 = vmatpush1.msra.mxu0 0.0
          %441 = vmatprep.subr.mxu0 0.0
          %442 = vmatpush1.msra.mxu0 0.0
          %443 = vmatprep.subr.mxu0 0.0
          %444 = vmatpush1.msra.mxu0 0.0
          %445 = vmatprep.subr.mxu0 0.0
          %446 = vmatpush1.msra.mxu0 0.0
          %447 = vmatprep.subr.mxu0 0.0
          %448 = vmatpush1.msra.mxu0 0.0
          %449 = vmatprep.subr.mxu0 0.0
          %450 = vmatpush1.msra.mxu0 0.0
          %451 = vmatprep.subr.mxu0 0.0
          %452 = vmatpush1.msra.mxu0 0.0
          %453 = vmatprep.subr.mxu0 0.0
          %454 = vmatpush1.msra.mxu0 0.0
          %455 = vmatprep.subr.mxu0 0.0
          %456 = vmatpush1.msra.mxu0 0.0
          %457 = vmatprep.subr.mxu0 0.0
          %458 = vmatpush1.msra.mxu0 0.0
          %459 = vmatprep.subr.mxu0 0.0
          %460 = vmatpush1.msra.mxu0 0.0
          %461 = vmatprep.subr.mxu0 0.0
          %462 = vmatpush1.msra.mxu0 0.0
          %463 = vmatprep.subr.mxu0 0.0
          %464 = vmatpush1.msra.mxu0 0.0
          %465 = vmatprep.subr.mxu0 0.0
          %466 = vmatpush1.msra.mxu0 0.0
          %467 = vmatprep.subr.mxu0 0.0
          %468 = vmatpush1.msra.mxu0 0.0
          %469 = vmatprep.mubr.f32.mxu0 0.0
          %470 = vmatmul.mubr.f32.gmra.mrb[0].mxu0 %v403
          %v471 = vpop.f32.mrb[0].mxu0
          %v472 = vadd.f32 %v400, %v471
          %v473 = vpop.f32.mrb[0].mxu0
          %474 = vdwg.mxu0
          %475 = vst.msk [vmem:[#allocation2] sm:$0x1] %vm393, %v472
        $region64: #{tpu_custom_call.1} parent=43 // pred_fallthru
          _
        %v476 = vld [vmem:[%s339] sm:$0x1]
        %v477 = vld [vmem:[%s339 + $0x1] sm:$0x1]
        %v478 = vld [vmem:[%s339 + $0x2] sm:$0x1]
        %v479 = vld [vmem:[%s339 + $0x3] sm:$0x1]
        %v480 = vld [vmem:[%s339 + $0x4] sm:$0x1]
        %v481 = vld [vmem:[%s339 + $0x5] sm:$0x1]
        %v482 = vld [vmem:[%s339 + $0x6] sm:$0x1]
        %v483 = vld [vmem:[%s339 + $0x7] sm:$0x1]
        %v484 = vld [vmem:[#allocation12] sm:$0xff]
        %v485 = vld [vmem:[#allocation12 + $0x8] sm:$0xff]
        %v486 = vld [vmem:[#allocation12 + $0x10] sm:$0xff]
        %v487 = vld [vmem:[#allocation12 + $0x18] sm:$0xff]
        %v488 = vld [vmem:[#allocation2] sm:$0x1]
        %v490 = vlaneseq
        %v491 = vshrl.u32 %v490, 7
        %v492 = vsub.s32 0, %v491
        %v493 = vrot.slane %v488, %v492
        %v503 = vcombine.low %v476, %v477
        %v504 = vcombine.low %v478, %v479
        %v505 = vcombine.low %v480, %v481
        %v506 = vcombine.low %v482, %v483
        %v508 = vunpack.c.l.s4 1966171168
        %v509 = vunpack.c.0.s8 %v508
        %v510 = vlaneseq
        %v511 = vshrl.u32 %v510, 7
        %v512 = vsub.s32 %v509, %v511
        %v513 = vrot.slane %v503, %v512
        %v515 = vunpack.c.l.s4 1966171168
        %v516 = vunpack.c.0.s8 %v515
        %v517 = vlaneseq
        %v518 = vshrl.u32 %v517, 7
        %v519 = vsub.s32 %v516, %v518
        %v520 = vrot.slane %v504, %v519
        %v522 = vunpack.c.l.s4 1966171168
        %v523 = vunpack.c.0.s8 %v522
        %v524 = vlaneseq
        %v525 = vshrl.u32 %v524, 7
        %v526 = vsub.s32 %v523, %v525
        %v527 = vrot.slane %v505, %v526
        %v529 = vunpack.c.l.s4 1966171168
        %v530 = vunpack.c.0.s8 %v529
        %v531 = vlaneseq
        %v532 = vshrl.u32 %v531, 7
        %v533 = vsub.s32 %v530, %v532
        %v534 = vrot.slane %v506, %v533
        %v535 = vcombine.low %v513, %v520
        %v536 = vcombine.low %v527, %v534
        %v538 = vunpack.c.l.s4 1966171168
        %v539 = vunpack.c.0.s8 %v538
        %v540 = vlaneseq
        %v541 = vshrl.u32 %v540, 7
        %v542 = vsub.s32 %v539, %v541
        %v543 = vrot.slane %v535, %v542
        %v545 = vunpack.c.l.s4 1966171168
        %v546 = vunpack.c.0.s8 %v545
        %v547 = vlaneseq
        %v548 = vshrl.u32 %v547, 7
        %v549 = vsub.s32 %v546, %v548
        %v550 = vrot.slane %v536, %v549
        %v551 = vcombine.low %v543, %v550
        %vm552 = vcmask 261120
        %v553 = vsel %vm552, %v551, 0
        %555 = vmatprep.subr.mxu0 0.0
        %556 = vmatpush1.msra.mxu0 %v484
        %557 = vmatprep.subr.mxu0 0.0
        %558 = vmatpush1.msra.mxu0 %v485
        %559 = vmatprep.subr.mxu0 0.0
        %560 = vmatpush1.msra.mxu0 %v486
        %561 = vmatprep.subr.mxu0 0.0
        %562 = vmatpush1.msra.mxu0 %v487
        %563 = vmatprep.subr.mxu0 0.0
        %564 = vmatpush1.msra.mxu0 0.0
        %565 = vmatprep.subr.mxu0 0.0
        %566 = vmatpush1.msra.mxu0 0.0
        %567 = vmatprep.subr.mxu0 0.0
        %568 = vmatpush1.msra.mxu0 0.0
        %569 = vmatprep.subr.mxu0 0.0
        %570 = vmatpush1.msra.mxu0 0.0
        %571 = vmatprep.subr.mxu0 0.0
        %572 = vmatpush1.msra.mxu0 0.0
        %573 = vmatprep.subr.mxu0 0.0
        %574 = vmatpush1.msra.mxu0 0.0
        %575 = vmatprep.subr.mxu0 0.0
        %576 = vmatpush1.msra.mxu0 0.0
        %577 = vmatprep.subr.mxu0 0.0
        %578 = vmatpush1.msra.mxu0 0.0
        %579 = vmatprep.subr.mxu0 0.0
        %580 = vmatpush1.msra.mxu0 0.0
        %581 = vmatprep.subr.mxu0 0.0
        %582 = vmatpush1.msra.mxu0 0.0
        %583 = vmatprep.subr.mxu0 0.0
        %584 = vmatpush1.msra.mxu0 0.0
        %585 = vmatprep.subr.mxu0 0.0
        %586 = vmatpush1.msra.mxu0 0.0
        %587 = vmatprep.subr.mxu0 0.0
        %588 = vmatpush1.msra.mxu0 0.0
        %589 = vmatprep.subr.mxu0 0.0
        %590 = vmatpush1.msra.mxu0 0.0
        %591 = vmatprep.subr.mxu0 0.0
        %592 = vmatpush1.msra.mxu0 0.0
        %593 = vmatprep.subr.mxu0 0.0
        %594 = vmatpush1.msra.mxu0 0.0
        %595 = vmatprep.subr.mxu0 0.0
        %596 = vmatpush1.msra.mxu0 0.0
        %597 = vmatprep.subr.mxu0 0.0
        %598 = vmatpush1.msra.mxu0 0.0
        %599 = vmatprep.subr.mxu0 0.0
        %600 = vmatpush1.msra.mxu0 0.0
        %601 = vmatprep.subr.mxu0 0.0
        %602 = vmatpush1.msra.mxu0 0.0
        %603 = vmatprep.subr.mxu0 0.0
        %604 = vmatpush1.msra.mxu0 0.0
        %605 = vmatprep.subr.mxu0 0.0
        %606 = vmatpush1.msra.mxu0 0.0
        %607 = vmatprep.subr.mxu0 0.0
        %608 = vmatpush1.msra.mxu0 0.0
        %609 = vmatprep.subr.mxu0 0.0
        %610 = vmatpush1.msra.mxu0 0.0
        %611 = vmatprep.subr.mxu0 0.0
        %612 = vmatpush1.msra.mxu0 0.0
        %613 = vmatprep.subr.mxu0 0.0
        %614 = vmatpush1.msra.mxu0 0.0
        %615 = vmatprep.subr.mxu0 0.0
        %616 = vmatpush1.msra.mxu0 0.0
        %617 = vmatprep.subr.mxu0 0.0
        %618 = vmatpush1.msra.mxu0 0.0
        %619 = vmatprep.mubr.f32.mxu0 0.0
        %620 = vmatmul.mubr.f32.gmra.mrb[0].mxu0 %v553
        %v621 = vpop.f32.mrb[0].mxu0
        %v622 = vadd.f32 %v493, %v621
        %v623 = vpop.f32.mrb[0].mxu0
        %624 = vdwg.mxu0
        %v625 = vtanh.pop %v622
        %v626 = vld [vmem:[%s5] sm:$0x1]
        %v628 = vsel %vm552, %v626, 0
        %v631 = vsel %vm552, %v625, 0
        %633 = vmatprep.subr.mxu0 0.0
        %634 = vmatpush1.xpose.msra.mxu0 %v631
        %635 = vmatprep.subr.mxu0 0.0
        %636 = vmatpush1.xpose.msra.mxu0 0.0
        %637 = vmatprep.subr.mxu0 0.0
        %638 = vmatpush1.xpose.msra.mxu0 0.0
        %639 = vmatprep.subr.mxu0 0.0
        %640 = vmatpush1.xpose.msra.mxu0 0.0
        %641 = vmatprep.subr.mxu0 0.0
        %642 = vmatpush1.xpose.msra.mxu0 0.0
        %643 = vmatprep.subr.mxu0 0.0
        %644 = vmatpush1.xpose.msra.mxu0 0.0
        %645 = vmatprep.subr.mxu0 0.0
        %646 = vmatpush1.xpose.msra.mxu0 0.0
        %647 = vmatprep.subr.mxu0 0.0
        %648 = vmatpush1.xpose.msra.mxu0 0.0
        %649 = vmatprep.subr.mxu0 0.0
        %650 = vmatpush1.xpose.msra.mxu0 0.0
        %651 = vmatprep.subr.mxu0 0.0
        %652 = vmatpush1.xpose.msra.mxu0 0.0
        %653 = vmatprep.subr.mxu0 0.0
        %654 = vmatpush1.xpose.msra.mxu0 0.0
        %655 = vmatprep.subr.mxu0 0.0
        %656 = vmatpush1.xpose.msra.mxu0 0.0
        %657 = vmatprep.subr.mxu0 0.0
        %658 = vmatpush1.xpose.msra.mxu0 0.0
        %659 = vmatprep.subr.mxu0 0.0
        %660 = vmatpush1.xpose.msra.mxu0 0.0
        %661 = vmatprep.subr.mxu0 0.0
        %662 = vmatpush1.xpose.msra.mxu0 0.0
        %663 = vmatprep.subr.mxu0 0.0
        %664 = vmatpush1.xpose.msra.mxu0 0.0
        %665 = vmatprep.subr.mxu0 0.0
        %666 = vmatpush1.xpose.msra.mxu0 0.0
        %667 = vmatprep.subr.mxu0 0.0
        %668 = vmatpush1.xpose.msra.mxu0 0.0
        %669 = vmatprep.subr.mxu0 0.0
        %670 = vmatpush1.xpose.msra.mxu0 0.0
        %671 = vmatprep.subr.mxu0 0.0
        %672 = vmatpush1.xpose.msra.mxu0 0.0
        %673 = vmatprep.subr.mxu0 0.0
        %674 = vmatpush1.xpose.msra.mxu0 0.0
        %675 = vmatprep.subr.mxu0 0.0
        %676 = vmatpush1.xpose.msra.mxu0 0.0
        %677 = vmatprep.subr.mxu0 0.0
        %678 = vmatpush1.xpose.msra.mxu0 0.0
        %679 = vmatprep.subr.mxu0 0.0
        %680 = vmatpush1.xpose.msra.mxu0 0.0
        %681 = vmatprep.subr.mxu0 0.0
        %682 = vmatpush1.xpose.msra.mxu0 0.0
        %683 = vmatprep.subr.mxu0 0.0
        %684 = vmatpush1.xpose.msra.mxu0 0.0
        %685 = vmatprep.subr.mxu0 0.0
        %686 = vmatpush1.xpose.msra.mxu0 0.0
        %687 = vmatprep.subr.mxu0 0.0
        %688 = vmatpush1.xpose.msra.mxu0 0.0
        %689 = vmatprep.subr.mxu0 0.0
        %690 = vmatpush1.xpose.msra.mxu0 0.0
        %691 = vmatprep.subr.mxu0 0.0
        %692 = vmatpush1.xpose.msra.mxu0 0.0
        %693 = vmatprep.subr.mxu0 0.0
        %694 = vmatpush1.xpose.msra.mxu0 0.0
        %695 = vmatprep.subr.mxu0 0.0
        %696 = vmatpush1.xpose.msra.mxu0 0.0
        %697 = vmatprep.mubr.f32.mxu0 0.0
        %698 = vmatmul.mubr.f32.gmra.mrb[0].mxu0 %v628
        %v699 = vpop.f32.mrb[0].mxu0
        %v700 = vadd.f32 0.0, %v699
        %v701 = vpop.f32.mrb[0].mxu0
        %702 = vdwg.mxu0
        %v703 = vld [vmem:[#allocation3] sm:$0x1]
        %vm704 = vcmask 57344
        %v705 = vsel %vm704, %v700, -inf
        %706 = vmax.xlane.f32.xlu0 %v705
        %v707 = vpop.xlane.xlu0 %706
        %v708 = vmax.f32 %v703, %v707
        %v709 = vsub.f32 %v703, %v708
        %v710 = vmul.f32 %v709, 1.442695
        %v711 = vpow.pop %v710
        %713 = vset.pattern.permute.xlu0 0
        %714 = vperm.xlu0 %713, %v708
        %v715 = vpop.permute.xlu0 %714
        %v717 = vlaneseq
        %v718 = vshrl.u32 %v717, 7
        %v719 = vsub.s32 0, %v718
        %v720 = vrot.slane %v715, %v719
        %v721 = vsub.f32 %v700, %v720
        %v722 = vmul.f32 %v721, 1.442695
        %v723 = vpow.pop %v722
        %v724 = vld [vmem:[#allocation4] sm:$0x1]
        %v725 = vmul.f32 %v711, %v724
        %v726 = vsel %vm704, %v723, 0.0
        %727 = vadd.xlane.f32.xlu0 %v726
        %v728 = vpop.xlane.xlu0 %727
        %v729 = vadd.f32 %v725, %v728
        %vm730 = vcmask 0
        %731 = vst.msk [vmem:[#allocation4] sm:$0x1] %vm730, %v729
        %v732 = vld [vmem:[#allocation5] sm:$0x1]
        %734 = vset.pattern.permute.xlu0 0
        %735 = vperm.xlu0 %734, %v711
        %v736 = vpop.permute.xlu0 %735
        %v738 = vlaneseq
        %v739 = vshrl.u32 %v738, 7
        %v740 = vsub.s32 0, %v739
        %v741 = vrot.slane %v736, %v740
        %v742 = vmul.f32 %v741, %v732
        %vm744 = vcmask 64512
        %v746 = vsel %vm744, %v723, 0
        %748 = vmatprep.subr.mxu0 0.0
        %749 = vmatpush1.msra.mxu0 %v551
        %750 = vmatprep.subr.mxu0 0.0
        %751 = vmatpush1.msra.mxu0 0.0
        %752 = vmatprep.subr.mxu0 0.0
        %753 = vmatpush1.msra.mxu0 0.0
        %754 = vmatprep.subr.mxu0 0.0
        %755 = vmatpush1.msra.mxu0 0.0
        %756 = vmatprep.subr.mxu0 0.0
        %757 = vmatpush1.msra.mxu0 0.0
        %758 = vmatprep.subr.mxu0 0.0
        %759 = vmatpush1.msra.mxu0 0.0
        %760 = vmatprep.subr.mxu0 0.0
        %761 = vmatpush1.msra.mxu0 0.0
        %762 = vmatprep.subr.mxu0 0.0
        %763 = vmatpush1.msra.mxu0 0.0
        %764 = vmatprep.subr.mxu0 0.0
        %765 = vmatpush1.msra.mxu0 0.0
        %766 = vmatprep.subr.mxu0 0.0
        %767 = vmatpush1.msra.mxu0 0.0
        %768 = vmatprep.subr.mxu0 0.0
        %769 = vmatpush1.msra.mxu0 0.0
        %770 = vmatprep.subr.mxu0 0.0
        %771 = vmatpush1.msra.mxu0 0.0
        %772 = vmatprep.subr.mxu0 0.0
        %773 = vmatpush1.msra.mxu0 0.0
        %774 = vmatprep.subr.mxu0 0.0
        %775 = vmatpush1.msra.mxu0 0.0
        %776 = vmatprep.subr.mxu0 0.0
        %777 = vmatpush1.msra.mxu0 0.0
        %778 = vmatprep.subr.mxu0 0.0
        %779 = vmatpush1.msra.mxu0 0.0
        %780 = vmatprep.subr.mxu0 0.0
        %781 = vmatpush1.msra.mxu0 0.0
        %782 = vmatprep.subr.mxu0 0.0
        %783 = vmatpush1.msra.mxu0 0.0
        %784 = vmatprep.subr.mxu0 0.0
        %785 = vmatpush1.msra.mxu0 0.0
        %786 = vmatprep.subr.mxu0 0.0
        %787 = vmatpush1.msra.mxu0 0.0
        %788 = vmatprep.subr.mxu0 0.0
        %789 = vmatpush1.msra.mxu0 0.0
        %790 = vmatprep.subr.mxu0 0.0
        %791 = vmatpush1.msra.mxu0 0.0
        %792 = vmatprep.subr.mxu0 0.0
        %793 = vmatpush1.msra.mxu0 0.0
        %794 = vmatprep.subr.mxu0 0.0
        %795 = vmatpush1.msra.mxu0 0.0
        %796 = vmatprep.subr.mxu0 0.0
        %797 = vmatpush1.msra.mxu0 0.0
        %798 = vmatprep.subr.mxu0 0.0
        %799 = vmatpush1.msra.mxu0 0.0
        %800 = vmatprep.subr.mxu0 0.0
        %801 = vmatpush1.msra.mxu0 0.0
        %802 = vmatprep.subr.mxu0 0.0
        %803 = vmatpush1.msra.mxu0 0.0
        %804 = vmatprep.subr.mxu0 0.0
        %805 = vmatpush1.msra.mxu0 0.0
        %806 = vmatprep.subr.mxu0 0.0
        %807 = vmatpush1.msra.mxu0 0.0
        %808 = vmatprep.subr.mxu0 0.0
        %809 = vmatpush1.msra.mxu0 0.0
        %810 = vmatprep.subr.mxu0 0.0
        %811 = vmatpush1.msra.mxu0 0.0
        %812 = vmatprep.mubr.f32.mxu0 0.0
        %813 = vmatmul.mubr.f32.gmra.mrb[0].mxu0 %v746
        %v814 = vpop.f32.mrb[0].mxu0
        %v815 = vadd.f32 0.0, %v814
        %v816 = vpop.f32.mrb[0].mxu0
        %817 = vdwg.mxu0
        %v818 = vadd.f32 %v742, %v815
        %vm819 = vcmask 253952
        %820 = vst.msk [vmem:[#allocation5] sm:$0x1] %vm819, %v818
        %821 = vst.msk [vmem:[#allocation3] sm:$0x1] %vm730, %v708
        %s822 = scalar_lea.vmem %s378, %s37 [#allocation14]
        %823 = vst.msk [vmem:[%s822] sm:$0x1] %vm704, %v700
        // Predicated region
        $region65: #{tpu_custom_call.1} parent=43 // pred_check
          %p824 = pneg %p386
        $region66: #{tpu_custom_call.1} parent=43 // pred_check_branch
          %826 = sbr.rel (%p824) target = $region68
        $region67: #{tpu_custom_call.1} parent=43 // pred_region
          %v827 = vld [vmem:[#allocation4] sm:$0x1]
          %v828 = vrcp.pop %v827
          %v829 = vld [vmem:[%s378] sm:$0x1]
          %v830 = vld [vmem:[#allocation3] sm:$0x1]
          %832 = vset.pattern.permute.xlu0 0
          %833 = vperm.xlu0 %832, %v830
          %v834 = vpop.permute.xlu0 %833
          %v836 = vlaneseq
          %v837 = vshrl.u32 %v836, 7
          %v838 = vsub.s32 0, %v837
          %v839 = vrot.slane %v834, %v838
          %v840 = vsub.f32 %v829, %v839
          %v841 = vmul.f32 %v840, 1.442695
          %v842 = vpow.pop %v841
          %844 = vset.pattern.permute.xlu0 0
          %845 = vperm.xlu0 %844, %v828
          %v846 = vpop.permute.xlu0 %845
          %v848 = vlaneseq
          %v849 = vshrl.u32 %v848, 7
          %v850 = vsub.s32 0, %v849
          %v851 = vrot.slane %v846, %v850
          %v852 = vmul.f32 %v842, %v851
          %853 = vst.msk [vmem:[%s378] sm:$0x1] %vm704, %v852
          %v854 = vld [vmem:[#allocation5] sm:$0x1]
          %v855 = vmul.f32 %v854, %v851
          %856 = vst.msk [vmem:[%s384] sm:$0x1] %vm819, %v855
        $region68: #{tpu_custom_call.1} parent=43 // pred_fallthru
          _
        %s857 = sand.u32 %s190, 1
        %s858 = scalar_lea.sflag [#allocation8], %s857
        %s859 = sand.u32 %s190, 1
        %s860 = scalar_lea.vmem [#allocation14], %s859
        %s861 = sand.u32 %s216, 1
        %s862 = scalar_lea.sflag [#allocation16], %s861
        %s863 = sand.u32 %s216, 1
        %s864 = scalar_lea.vmem [#allocation15], %s863
        // Predicated region
        $region69: #{tpu_custom_call.1} parent=43 // pred_check
          %p865 = pneg %p200
        $region70: #{tpu_custom_call.1} parent=43 // pred_check_branch
          %867 = sbr.rel (%p865) target = $region72
        $region71: #{tpu_custom_call.1} parent=43 // pred_region
          %s869 = ssub.s32 16, 16
          %870 = vsyncadd %s858, %s869
          %s871 = smul.addr %s36, 16
          %s872 = scalar_lea.hbm %s6, %s871
          %s874 = sshll.u32 %s860, 4
          %s875 = int_to_ptr.vmem [resolvable:$true] %s874
          %877 = dma.vmem_to_hbm [thread:$0]  %s875, 16, %s872, %s858
        $region72: #{tpu_custom_call.1} parent=43 // pred_fallthru
          _
        // Predicated region
        $region73: #{tpu_custom_call.1} parent=43 // pred_check
          %p878 = pneg %p226
        $region74: #{tpu_custom_call.1} parent=43 // pred_check_branch
          %880 = sbr.rel (%p878) target = $region76
        $region75: #{tpu_custom_call.1} parent=43 // pred_region
          %s882 = ssub.s32 16, 16
          %883 = vsyncadd %s862, %s882
          %s884 = smul.addr %s36, 16
          %s885 = scalar_lea.hbm %s7, %s884
          %s887 = sshll.u32 %s864, 4
          %s888 = int_to_ptr.vmem [resolvable:$true] %s887
          %890 = dma.vmem_to_hbm [thread:$0]  %s888, 16, %s885, %s862
        $region76: #{tpu_custom_call.1} parent=43 // pred_fallthru
          _
      $region44: #{tpu_custom_call.1} parent=5 // pred_fallthru
        _
      %p891 = scmp.le.s32.totalorder 2, %s27
      // Predicated region
      $region77: #{tpu_custom_call.1} parent=5 // pred_check
        %p892 = pneg %p891
      $region78: #{tpu_custom_call.1} parent=5 // pred_check_branch
        %894 = sbr.rel (%p892) target = $region80
      $region79: #{tpu_custom_call.1} parent=5 // pred_region
        %s895 = ssub.s32 %s27, 2
        // Predicated region
        $region81: #{tpu_custom_call.1} parent=79 // pred_check
          %p896 = pneg %p206
        $region82: #{tpu_custom_call.1} parent=79 // pred_check_branch
          %898 = sbr.rel (%p896) target = $region84
        $region83: #{tpu_custom_call.1} parent=79 // pred_region
          %s899 = sand.u32 %s191, 1
          %s900 = scalar_lea.sflag [#allocation8], %s899
          %s901 = sand.u32 %s191, 1
          %s902 = scalar_lea.vmem [#allocation14], %s901
          %903 = dma.done %s900, 16
        $region84: #{tpu_custom_call.1} parent=79 // pred_fallthru
          _
        // Predicated region
        $region85: #{tpu_custom_call.1} parent=79 // pred_check
          %p904 = pneg %p232
        $region86: #{tpu_custom_call.1} parent=79 // pred_check_branch
          %906 = sbr.rel (%p904) target = $region88
        $region87: #{tpu_custom_call.1} parent=79 // pred_region
          %s907 = sand.u32 %s217, 1
          %s908 = scalar_lea.sflag [#allocation16], %s907
          %s909 = sand.u32 %s217, 1
          %s910 = scalar_lea.vmem [#allocation15], %s909
          %911 = dma.done %s908, 16
        $region88: #{tpu_custom_call.1} parent=79 // pred_fallthru
          _
      $region80: #{tpu_custom_call.1} parent=5 // pred_fallthru
        _
    $region6: #{tpu_custom_call.1} parent=1 // loop_footer
      %s31 = sadd.s32 1, %s27
    $region7: #{tpu_custom_call.1} parent=1 // loop_footer_branch
      %26 = sbr.rel target = $region3
    $region8: #{tpu_custom_call.1} parent=1 // loop_exit
      _
    %912 = vsyncpa [#allocation7], 1
    %s913 = scalar_lea.sflag [#allocation7], 1
    %914 = vsyncpa %s913, 1
    %915 = vsyncpa [#allocation10], 1
    %s916 = scalar_lea.sflag [#allocation10], 1
    %917 = vsyncpa %s916, 1
    %918 = vsyncpa [#allocation13], 1
    %919 = vsyncpa [#allocation8], 1
    %s920 = scalar_lea.sflag [#allocation8], 1
    %921 = vsyncpa %s920, 1
    %922 = vsyncpa [#allocation16], 1
    %s923 = scalar_lea.sflag [#allocation16], 1
    %924 = vsyncpa %s923, 1

</llo_original>
